<compile_context>
chip_gen: v5e
topology: v5e:2x2
jax: 0.10.0
libtpu: 0.0.40
codegen_flags: <defaults>
</compile_context>

<pallas_src>
import functools

import jax
import jax.numpy as jnp
from jax.experimental import pallas as pl
from jax.experimental.pallas import tpu as pltpu


# Scoped VMEM request (valid on v5e/v6e/v7x; v7x only has 64 MiB physical) and
# the budget used to derive the batch tile (headroom below the limit).
_VMEM_LIMIT_BYTES = 40 * 1024 * 1024
_VMEM_BUDGET_BYTES = 28 * 1024 * 1024


def _cdiv(a, b):
    return -(-a // b)


def _round_up(x, m):
    return ((x + m - 1) // m) * m


def _leaky_relu(x, negative_slope=0.2):
    return jnp.where(x > 0, x, negative_slope * x)


def _choose_tile_b(batch, d_in, bn_p, d_out_p, x_itemsize, compute_itemsize,
                   out_itemsize, weight_bytes, max_block_b):
    """Pick a batch tile: multiple of 8 sublanes, VMEM-budgeted, >=2 grid steps.

    The streamed emb/cls/out tiles are double-buffered; the grid-invariant
    weights are conservatively counted twice as well.
    TODO(synk): single-buffer the grid-invariant weight BlockSpecs
    (pipeline_mode=pl.Buffered(1)) to halve their resident VMEM footprint at
    production bottleneck sizes.
    """
    stream_row = 2 * (d_in * x_itemsize + d_out_p * out_itemsize)
    # In-kernel intermediates per row: h (f32), its compute-dtype cast, and the
    # layer-3 f32 result before the output cast.
    scratch_row = bn_p * (2 * 4 + compute_itemsize) + d_out_p * 4
    row_bytes = stream_row + scratch_row
    avail = max(_VMEM_BUDGET_BYTES - 2 * weight_bytes, 8 * row_bytes)
    vmem_tile = max(avail // row_bytes, 8)
    max_tile = max(8, (min(vmem_tile, max_block_b) // 8) * 8)

    batch8 = _round_up(batch, 8)
    n_steps = _cdiv(batch8, max_tile)
    # Keep the grid at >=2 steps (>=4 for big batches) when the batch allows so
    # v7x's two TensorCores can shard the batch axis and DMAs overlap compute.
    if batch8 >= 4 * 2048:
        n_steps = max(n_steps, 4)
    elif batch8 >= 16:
        n_steps = max(n_steps, 2)
    tile_b = _round_up(_cdiv(batch8, n_steps), 8)
    return min(tile_b, batch8)


def ldif_mlp_kernel(emb_ref, cls_ref,
                    w1e_ref, w1c_ref, b1_ref,
                    w2_ref, b2_ref,
                    w3_ref, b3_ref,
                    o_ref):
    """Fused 3-layer MLP with the input concat folded into a split first matmul.

    emb_ref : (TB, d_emb)   embedding tile
    cls_ref : (TB, d_cls)   size_cls tile
    w*_ref  : (in, out) weights (f32 or bf16), b*_ref: (1, out) f32 biases
    o_ref   : (TB, d_out_padded) structured implicit activations (flat)
    """
    cdt = w1e_ref.dtype  # MXU input dtype (f32 or bf16)

    # Layer 1: cat([emb, cls]) @ W1 == emb @ W1_top + cls @ W1_bottom.
    h = (jnp.dot(emb_ref[...].astype(cdt), w1e_ref[...],
                 preferred_element_type=jnp.float32)
         + jnp.dot(cls_ref[...].astype(cdt), w1c_ref[...],
                   preferred_element_type=jnp.float32)
         + b1_ref[...])
    h = _leaky_relu(h)

    # Layer 2.
    h = jnp.dot(h.astype(cdt), w2_ref[...],
                preferred_element_type=jnp.float32) + b2_ref[...]
    h = _leaky_relu(h)

    # Layer 3 (no activation).
    y = jnp.dot(h.astype(cdt), w3_ref[...],
                preferred_element_type=jnp.float32) + b3_ref[...]
    o_ref[...] = y.astype(o_ref.dtype)


@functools.partial(
    jax.jit,
    static_argnames=("element_count", "element_embedding_length",
                     "max_block_b", "out_dtype"))
def ldif_encoder_forward(embedding, size_cls, params,
                         element_count, element_embedding_length,
                         max_block_b=8192, out_dtype=jnp.float32):
    """Concat-free fused MLP; concat folded into the kernel, reshape is glue."""
    w1e, w1c, b1 = params["w1_emb"], params["w1_cls"], params["b1"]
    w2, b2 = params["w2"], params["b2"]
    w3, b3 = params["w3"], params["b3"]

    compute_dtype = w1e.dtype
    B, d_emb = embedding.shape
    d_cls = size_cls.shape[1]
    bn = w2.shape[0]
    d_out = w3.shape[1]
    assert d_out == element_count * element_embedding_length

    # Lane-dense hidden & output dims: zero-pad the bottleneck and the output
    # feature dim to multiples of 128.  Padded hidden columns get zero weights
    # and zero bias, so they stay exactly zero through LeakyReLU and contribute
    # nothing downstream (math unchanged).  Padded output columns are sliced off.
    bn_p = _round_up(bn, 128)
    d_out_p = _round_up(d_out, 128)
    if bn_p != bn:
        w1e = jnp.pad(w1e, ((0, 0), (0, bn_p - bn)))
        w1c = jnp.pad(w1c, ((0, 0), (0, bn_p - bn)))
        b1 = jnp.pad(b1, ((0, 0), (0, bn_p - bn)))
        w2 = jnp.pad(w2, ((0, bn_p - bn), (0, bn_p - bn)))
        b2 = jnp.pad(b2, ((0, 0), (0, bn_p - bn)))
        w3 = jnp.pad(w3, ((0, bn_p - bn), (0, 0)))
    if d_out_p != d_out:
        w3 = jnp.pad(w3, ((0, 0), (0, d_out_p - d_out)))
        b3 = jnp.pad(b3, ((0, 0), (0, d_out_p - d_out)))

    # Cast streamed activations to the MXU compute dtype outside the kernel
    # (halves the x DMA bytes when weights are bf16).
    if embedding.dtype != compute_dtype:
        embedding = embedding.astype(compute_dtype)
        size_cls = size_cls.astype(compute_dtype)

    weight_bytes = sum(int(a.size) * a.dtype.itemsize
                       for a in (w1e, w1c, b1, w2, b2, w3, b3))
    x_itemsize = jnp.dtype(embedding.dtype).itemsize
    out_itemsize = jnp.dtype(out_dtype).itemsize
    tile_b = _choose_tile_b(B, d_emb + d_cls, bn_p, d_out_p,
                            x_itemsize, jnp.dtype(compute_dtype).itemsize,
                            out_itemsize, weight_bytes, max_block_b)
    # No batch padding: tile_b is a multiple of 8 so partial last blocks are
    # legal; Pallas masks the out-of-bounds rows on read/write.
    n_steps = _cdiv(B, tile_b)

    cost = pl.CostEstimate(
        flops=2 * B * ((d_emb + d_cls) * bn_p + bn_p * bn_p + bn_p * d_out_p),
        transcendentals=0,
        bytes_accessed=(B * (d_emb + d_cls) * x_itemsize + weight_bytes
                        + B * d_out_p * out_itemsize))

    out_flat = pl.pallas_call(
        ldif_mlp_kernel,
        out_shape=jax.ShapeDtypeStruct((B, d_out_p), out_dtype),
        grid=(n_steps,),
        in_specs=[
            pl.BlockSpec((tile_b, d_emb), lambda i: (i, 0)),
            pl.BlockSpec((tile_b, d_cls), lambda i: (i, 0)),
            pl.BlockSpec(w1e.shape, lambda i: (0, 0)),
            pl.BlockSpec(w1c.shape, lambda i: (0, 0)),
            pl.BlockSpec(b1.shape, lambda i: (0, 0)),
            pl.BlockSpec(w2.shape, lambda i: (0, 0)),
            pl.BlockSpec(b2.shape, lambda i: (0, 0)),
            pl.BlockSpec(w3.shape, lambda i: (0, 0)),
            pl.BlockSpec(b3.shape, lambda i: (0, 0)),
        ],
        out_specs=pl.BlockSpec((tile_b, d_out_p), lambda i: (i, 0)),
        compiler_params=pltpu.CompilerParams(
            dimension_semantics=("parallel",),
            vmem_limit_bytes=_VMEM_LIMIT_BYTES),
        cost_estimate=cost,
    )(embedding, size_cls, w1e, w1c, b1, w2, b2, w3, b3)

    if d_out_p != d_out:
        out_flat = out_flat[:, :d_out]
    return out_flat.reshape(-1, element_count, element_embedding_length)


def init_params(key, bottleneck_size, n_classes, out_dim, dtype=jnp.float32):
    """Deterministic synthetic parameters matching the nn.Linear shapes.

    W1 is stored pre-split into its embedding / size_cls row blocks so the
    concat can be folded into the kernel.  Biases stay f32 regardless of dtype.
    """
    k1, k2, k3, k4, k5, k6 = jax.random.split(key, 6)
    scale = 0.02
    return {
        "w1_emb": (scale * jax.random.normal(
            k1, (bottleneck_size, bottleneck_size), jnp.float32)).astype(dtype),
        "w1_cls": (scale * jax.random.normal(
            k2, (n_classes, bottleneck_size), jnp.float32)).astype(dtype),
        "b1": scale * jax.random.normal(k3, (1, bottleneck_size), jnp.float32),
        "w2": (scale * jax.random.normal(
            k4, (bottleneck_size, bottleneck_size), jnp.float32)).astype(dtype),
        "b2": scale * jax.random.normal(k5, (1, bottleneck_size), jnp.float32),
        "w3": (scale * jax.random.normal(
            k6, (bottleneck_size, out_dim), jnp.float32)).astype(dtype),
        "b3": scale * jax.random.normal(
            jax.random.fold_in(k6, 1), (1, out_dim), jnp.float32),
    }


def ldif_encoder_reference(embedding, size_cls, params,
                           element_count, element_embedding_length):
    """Pure-JAX f32 reference (same math as the PyTorch module)."""
    w1 = jnp.concatenate([params["w1_emb"].astype(jnp.float32),
                          params["w1_cls"].astype(jnp.float32)], axis=0)
    x = jnp.concatenate([embedding, size_cls], axis=1).astype(jnp.float32)
    h = x @ w1 + params["b1"]
    h = jnp.where(h > 0, h, 0.2 * h)
    h = h @ params["w2"].astype(jnp.float32) + params["b2"]
    h = jnp.where(h > 0, h, 0.2 * h)
    y = h @ params["w3"].astype(jnp.float32) + params["b3"]
    return y.reshape(-1, element_count, element_embedding_length)


if __name__ == "__main__":
    # Small, forward-consistent config.
    batch = 2
    bottleneck_size = 32            # config['model']['bottleneck_size']
    n_classes = 8
    element_count = 8               # config['model']['element_count']
    sym_element_count = 4           # metadata only; unused by forward
    implicit_parameter_length = 6   # config['model']['implicit_parameter_length']
    element_embedding_length = 10 + implicit_parameter_length   # = 16
    out_dim = element_count * element_embedding_length          # = 128

    key = jax.random.PRNGKey(0)
    k_emb, k_cls, k_par, k_emb2, k_cls2, k_emb3, k_cls3 = jax.random.split(key, 7)

    embedding = jax.random.normal(k_emb, (batch, bottleneck_size), jnp.float32)
    size_cls = jax.random.normal(k_cls, (batch, n_classes), jnp.float32)

    # --- fp32 path: exact PyTorch semantics, strict tolerance -----------------
    params_f32 = init_params(k_par, bottleneck_size, n_classes, out_dim,
                             dtype=jnp.float32)
    out = jax.block_until_ready(ldif_encoder_forward(
        embedding, size_cls, params_f32,
        element_count=element_count,
        element_embedding_length=element_embedding_length))
    ref = ldif_encoder_reference(embedding, size_cls, params_f32,
                                 element_count, element_embedding_length)
    assert out.shape == (batch, element_count, element_embedding_length), out.shape
    assert jnp.allclose(out, ref, atol=1e-5, rtol=1e-5), "fp32 mismatch vs reference"

    # --- fp32 path, larger batch: multi-step grid + partial last block --------
    batch3 = 300                     # tile 152 -> grid of 2, ragged last block
    embedding3 = jax.random.normal(k_emb3, (batch3, bottleneck_size), jnp.float32)
    size_cls3 = jax.random.normal(k_cls3, (batch3, n_classes), jnp.float32)
    out3 = jax.block_until_ready(ldif_encoder_forward(
        embedding3, size_cls3, params_f32,
        element_count=element_count,
        element_embedding_length=element_embedding_length))
    ref3 = ldif_encoder_reference(embedding3, size_cls3, params_f32,
                                  element_count, element_embedding_length)
    assert out3.shape == (batch3, element_count, element_embedding_length), out3.shape
    assert jnp.allclose(out3, ref3, atol=2e-5, rtol=1e-5), "fp32 batch mismatch"

    # --- bf16 weights + bf16 output + small tiles (tiling / pipeline path) ----
    batch2 = 50                      # grid of 4 tiles of 16, last block partial
    embedding2 = jax.random.normal(k_emb2, (batch2, bottleneck_size), jnp.float32)
    size_cls2 = jax.random.normal(k_cls2, (batch2, n_classes), jnp.float32)
    params_bf16 = {k: (v.astype(jnp.bfloat16) if k.startswith("w") else v)
                   for k, v in params_f32.items()}
    out2 = jax.block_until_ready(ldif_encoder_forward(
        embedding2, size_cls2, params_bf16,
        element_count=element_count,
        element_embedding_length=element_embedding_length,
        max_block_b=16, out_dtype=jnp.bfloat16))
    ref2 = ldif_encoder_reference(embedding2, size_cls2, params_bf16,
                                  element_count, element_embedding_length)
    assert out2.shape == (batch2, element_count, element_embedding_length), out2.shape
    assert out2.dtype == jnp.bfloat16, out2.dtype
    assert jnp.allclose(out2.astype(jnp.float32), ref2,
                        atol=5e-3, rtol=5e-2), "bf16 mismatch vs reference"

    print("KERNEL_OK")
</pallas_src>

<mosaic_0001>
module attributes {stable_mosaic.version = 11 : i64} {
  func.func @ldif_mlp_kernel(%arg0: i32, %arg1: memref<8x32xf32, #tpu.memory_space<vmem>>, %arg2: memref<8x8xf32, #tpu.memory_space<vmem>>, %arg3: memref<32x128xf32, #tpu.memory_space<vmem>>, %arg4: memref<8x128xf32, #tpu.memory_space<vmem>>, %arg5: memref<1x128xf32, #tpu.memory_space<vmem>>, %arg6: memref<128x128xf32, #tpu.memory_space<vmem>>, %arg7: memref<1x128xf32, #tpu.memory_space<vmem>>, %arg8: memref<128x128xf32, #tpu.memory_space<vmem>>, %arg9: memref<1x128xf32, #tpu.memory_space<vmem>>, %arg10: memref<8x128xf32, #tpu.memory_space<vmem>>) attributes {dimension_semantics = [#tpu.dimension_semantics<parallel>], iteration_bounds = array<i64: 1>, scalar_prefetch = 0 : i64, scratch_operands = 0 : i64, tpu.core_type = #tpu.core_type<tc>, window_params = [{transform_indices = @transform_0, window_bounds = array<i64: 8, 32>}, {transform_indices = @transform_1, window_bounds = array<i64: 8, 8>}, {pipeline_mode = #tpu.pipeline_mode<synchronous>, transform_indices = @transform_2, window_bounds = array<i64: 32, 128>}, {pipeline_mode = #tpu.pipeline_mode<synchronous>, transform_indices = @transform_3, window_bounds = array<i64: 8, 128>}, {pipeline_mode = #tpu.pipeline_mode<synchronous>, transform_indices = @transform_4, window_bounds = array<i64: 1, 128>}, {pipeline_mode = #tpu.pipeline_mode<synchronous>, transform_indices = @transform_5, window_bounds = array<i64: 128, 128>}, {pipeline_mode = #tpu.pipeline_mode<synchronous>, transform_indices = @transform_6, window_bounds = array<i64: 1, 128>}, {pipeline_mode = #tpu.pipeline_mode<synchronous>, transform_indices = @transform_7, window_bounds = array<i64: 128, 128>}, {pipeline_mode = #tpu.pipeline_mode<synchronous>, transform_indices = @transform_8, window_bounds = array<i64: 1, 128>}, {transform_indices = @transform_9, window_bounds = array<i64: 8, 128>}]} {
    %c0 = arith.constant 0 : index
    %c0_0 = arith.constant 0 : index
    %0 = vector.load %arg1[%c0, %c0_0] : memref<8x32xf32, #tpu.memory_space<vmem>>, vector<8x32xf32>
    %c0_1 = arith.constant 0 : index
    %c0_2 = arith.constant 0 : index
    %1 = vector.load %arg3[%c0_1, %c0_2] : memref<32x128xf32, #tpu.memory_space<vmem>>, vector<32x128xf32>
    %cst = arith.constant dense<0.000000e+00> : vector<8x128xf32>
    %2 = tpu.matmul %0, %1, %cst {dimension_numbers = #tpu.dot_dimension_numbers<[1], [0], [0], [1], [0, 0, 1, 1], [], []>} : vector<8x32xf32>, vector<32x128xf32>, vector<8x128xf32> -> vector<8x128xf32>
    %c0_3 = arith.constant 0 : index
    %c0_4 = arith.constant 0 : index
    %3 = vector.load %arg2[%c0_3, %c0_4] : memref<8x8xf32, #tpu.memory_space<vmem>>, vector<8x8xf32>
    %c0_5 = arith.constant 0 : index
    %c0_6 = arith.constant 0 : index
    %4 = vector.load %arg4[%c0_5, %c0_6] : memref<8x128xf32, #tpu.memory_space<vmem>>, vector<8x128xf32>
    %cst_7 = arith.constant dense<0.000000e+00> : vector<8x128xf32>
    %5 = tpu.matmul %3, %4, %cst_7 {dimension_numbers = #tpu.dot_dimension_numbers<[1], [0], [0], [1], [0, 0, 1, 1], [], []>} : vector<8x8xf32>, vector<8x128xf32>, vector<8x128xf32> -> vector<8x128xf32>
    %6 = arith.addf %2, %5 : vector<8x128xf32>
    %c0_8 = arith.constant 0 : index
    %c0_9 = arith.constant 0 : index
    %7 = vector.load %arg5[%c0_8, %c0_9] : memref<1x128xf32, #tpu.memory_space<vmem>>, vector<1x128xf32>
    %8 = vector.broadcast %7 : vector<1x128xf32> to vector<8x128xf32>
    %9 = arith.addf %6, %8 : vector<8x128xf32>
    %cst_10 = arith.constant 0.000000e+00 : f32
    %10 = vector.broadcast %cst_10 : f32 to vector<8x128xf32>
    %11 = arith.cmpf ogt, %9, %10 : vector<8x128xf32>
    %cst_11 = arith.constant 2.000000e-01 : f32
    %12 = vector.broadcast %cst_11 : f32 to vector<8x128xf32>
    %13 = arith.mulf %12, %9 : vector<8x128xf32>
    %14 = arith.select %11, %9, %13 : vector<8x128xi1>, vector<8x128xf32>
    %c0_12 = arith.constant 0 : index
    %c0_13 = arith.constant 0 : index
    %15 = vector.load %arg6[%c0_12, %c0_13] : memref<128x128xf32, #tpu.memory_space<vmem>>, vector<128x128xf32>
    %cst_14 = arith.constant dense<0.000000e+00> : vector<8x128xf32>
    %16 = tpu.matmul %14, %15, %cst_14 {dimension_numbers = #tpu.dot_dimension_numbers<[1], [0], [0], [1], [0, 0, 1, 1], [], []>} : vector<8x128xf32>, vector<128x128xf32>, vector<8x128xf32> -> vector<8x128xf32>
    %c0_15 = arith.constant 0 : index
    %c0_16 = arith.constant 0 : index
    %17 = vector.load %arg7[%c0_15, %c0_16] : memref<1x128xf32, #tpu.memory_space<vmem>>, vector<1x128xf32>
    %18 = vector.broadcast %17 : vector<1x128xf32> to vector<8x128xf32>
    %19 = arith.addf %16, %18 : vector<8x128xf32>
    %cst_17 = arith.constant 0.000000e+00 : f32
    %20 = vector.broadcast %cst_17 : f32 to vector<8x128xf32>
    %21 = arith.cmpf ogt, %19, %20 : vector<8x128xf32>
    %cst_18 = arith.constant 2.000000e-01 : f32
    %22 = vector.broadcast %cst_18 : f32 to vector<8x128xf32>
    %23 = arith.mulf %22, %19 : vector<8x128xf32>
    %24 = arith.select %21, %19, %23 : vector<8x128xi1>, vector<8x128xf32>
    %c0_19 = arith.constant 0 : index
    %c0_20 = arith.constant 0 : index
    %25 = vector.load %arg8[%c0_19, %c0_20] : memref<128x128xf32, #tpu.memory_space<vmem>>, vector<128x128xf32>
    %cst_21 = arith.constant dense<0.000000e+00> : vector<8x128xf32>
    %26 = tpu.matmul %24, %25, %cst_21 {dimension_numbers = #tpu.dot_dimension_numbers<[1], [0], [0], [1], [0, 0, 1, 1], [], []>} : vector<8x128xf32>, vector<128x128xf32>, vector<8x128xf32> -> vector<8x128xf32>
    %c0_22 = arith.constant 0 : index
    %c0_23 = arith.constant 0 : index
    %27 = vector.load %arg9[%c0_22, %c0_23] : memref<1x128xf32, #tpu.memory_space<vmem>>, vector<1x128xf32>
    %28 = vector.broadcast %27 : vector<1x128xf32> to vector<8x128xf32>
    %29 = arith.addf %26, %28 : vector<8x128xf32>
    %c0_24 = arith.constant 0 : index
    %c0_25 = arith.constant 0 : index
    %30 = vector.load %arg10[%c0_24, %c0_25] : memref<8x128xf32, #tpu.memory_space<vmem>>, vector<8x128xf32>
    tpu.vector_store %arg10[%c0_24, %c0_25], %29 {strides = array<i32>} : memref<8x128xf32, #tpu.memory_space<vmem>>, vector<8x128xf32>,
    return
  }
  func.func @transform_0(%arg0: i32) -> (i32, i32) {
    %c0_i32 = arith.constant 0 : i32
    %c0_i32_0 = arith.constant 0 : i32
    return %arg0, %c0_i32 : i32, i32
  }
  func.func @transform_1(%arg0: i32) -> (i32, i32) {
    %c0_i32 = arith.constant 0 : i32
    %c0_i32_0 = arith.constant 0 : i32
    return %arg0, %c0_i32 : i32, i32
  }
  func.func @transform_2(%arg0: i32) -> (i32, i32) {
    %c0_i32 = arith.constant 0 : i32
    %c0_i32_0 = arith.constant 0 : i32
    %c0_i32_1 = arith.constant 0 : i32
    return %c0_i32, %c0_i32_0 : i32, i32
  }
  func.func @transform_3(%arg0: i32) -> (i32, i32) {
    %c0_i32 = arith.constant 0 : i32
    %c0_i32_0 = arith.constant 0 : i32
    %c0_i32_1 = arith.constant 0 : i32
    return %c0_i32, %c0_i32_0 : i32, i32
  }
  func.func @transform_4(%arg0: i32) -> (i32, i32) {
    %c0_i32 = arith.constant 0 : i32
    %c0_i32_0 = arith.constant 0 : i32
    %c0_i32_1 = arith.constant 0 : i32
    return %c0_i32, %c0_i32_0 : i32, i32
  }
  func.func @transform_5(%arg0: i32) -> (i32, i32) {
    %c0_i32 = arith.constant 0 : i32
    %c0_i32_0 = arith.constant 0 : i32
    %c0_i32_1 = arith.constant 0 : i32
    return %c0_i32, %c0_i32_0 : i32, i32
  }
  func.func @transform_6(%arg0: i32) -> (i32, i32) {
    %c0_i32 = arith.constant 0 : i32
    %c0_i32_0 = arith.constant 0 : i32
    %c0_i32_1 = arith.constant 0 : i32
    return %c0_i32, %c0_i32_0 : i32, i32
  }
  func.func @transform_7(%arg0: i32) -> (i32, i32) {
    %c0_i32 = arith.constant 0 : i32
    %c0_i32_0 = arith.constant 0 : i32
    %c0_i32_1 = arith.constant 0 : i32
    return %c0_i32, %c0_i32_0 : i32, i32
  }
  func.func @transform_8(%arg0: i32) -> (i32, i32) {
    %c0_i32 = arith.constant 0 : i32
    %c0_i32_0 = arith.constant 0 : i32
    %c0_i32_1 = arith.constant 0 : i32
    return %c0_i32, %c0_i32_0 : i32, i32
  }
  func.func @transform_9(%arg0: i32) -> (i32, i32) {
    %c0_i32 = arith.constant 0 : i32
    %c0_i32_0 = arith.constant 0 : i32
    return %arg0, %c0_i32 : i32, i32
  }
}

</mosaic_0001>

<llo_original>
// kernel: ldif_encoder_forward.1
$region0: #{ldif_encoder_forward.1}
  #allocation0 [shape = 'u32[]', space=smem, size = 0x4, offset = 0x4, fixed_abs, tag = 'smem constant byte address 0x4 - core index']
  #allocation1 [shape = 'u32[72,128]{1,0:T(1,128)}', space=vmem, size = 0x9000, scoped, tag = 'internal scratch']
  %s0 = inlined_call_operand.vmem [shape: f32[2,32], index: 0, kind: input, shape index: {}]
  %s1 = inlined_call_operand.vmem [shape: f32[2,8], index: 1, kind: input, shape index: {}]
  %s2 = inlined_call_operand.vmem [shape: f32[32,128], index: 2, kind: input, shape index: {}]
  %s3 = inlined_call_operand.vmem [shape: f32[8,128], index: 3, kind: input, shape index: {}]
  %s4 = inlined_call_operand.vmem [shape: f32[1,128], index: 4, kind: input, shape index: {}]
  %s5 = inlined_call_operand.vmem [shape: f32[128,128], index: 5, kind: input, shape index: {}]
  %s6 = inlined_call_operand.vmem [shape: f32[1,128], index: 6, kind: input, shape index: {}]
  %s7 = inlined_call_operand.vmem [shape: f32[128,128], index: 7, kind: input, shape index: {}]
  %s8 = inlined_call_operand.vmem [shape: f32[1,128], index: 8, kind: input, shape index: {}]
  %s9 = inlined_call_operand.vmem [shape: f32[2,128], index: 9, kind: output, shape index: {}]
  %s10 = sld [smem:[#allocation0]]
  $region76: #{ldif_encoder_forward.1} parent=0
    _
  %s12 = ssub.s32 1, %s10
  %s13 = scalar_select 0, %s12, %s10
  $region1: #{ldif_encoder_forward.1} parent=0
    #allocation2 [shape = 'u8[4096]{0}', space=vmem, size = 0x1000, scoped, tag = 'output window, operand 0, single buffered']
    // Predicated region
    $region2: #{ldif_encoder_forward.1} parent=1 // pred_check
      _
    $region3: #{ldif_encoder_forward.1} parent=1 // pred_check_branch
      %15 = sbr.rel (0) target = $region5
    $region4: #{ldif_encoder_forward.1} parent=1 // pred_region
      _
    $region5: #{ldif_encoder_forward.1} parent=1 // pred_fallthru
      _
    // Predicated region
    $region6: #{ldif_encoder_forward.1} parent=1 // pred_check
      _
    $region7: #{ldif_encoder_forward.1} parent=1 // pred_check_branch
      %17 = sbr.rel (0) target = $region9
    $region8: #{ldif_encoder_forward.1} parent=1 // pred_region
      _
    $region9: #{ldif_encoder_forward.1} parent=1 // pred_fallthru
      _
    // Predicated region
    $region10: #{ldif_encoder_forward.1} parent=1 // pred_check
      _
    $region11: #{ldif_encoder_forward.1} parent=1 // pred_check_branch
      %19 = sbr.rel (0) target = $region13
    $region12: #{ldif_encoder_forward.1} parent=1 // pred_region
      _
    $region13: #{ldif_encoder_forward.1} parent=1 // pred_fallthru
      _
    // Predicated region
    $region14: #{ldif_encoder_forward.1} parent=1 // pred_check
      _
    $region15: #{ldif_encoder_forward.1} parent=1 // pred_check_branch
      %21 = sbr.rel (0) target = $region17
    $region16: #{ldif_encoder_forward.1} parent=1 // pred_region
      _
    $region17: #{ldif_encoder_forward.1} parent=1 // pred_fallthru
      _
    // Predicated region
    $region18: #{ldif_encoder_forward.1} parent=1 // pred_check
      _
    $region19: #{ldif_encoder_forward.1} parent=1 // pred_check_branch
      %23 = sbr.rel (0) target = $region21
    $region20: #{ldif_encoder_forward.1} parent=1 // pred_region
      _
    $region21: #{ldif_encoder_forward.1} parent=1 // pred_fallthru
      _
    // Predicated region
    $region22: #{ldif_encoder_forward.1} parent=1 // pred_check
      _
    $region23: #{ldif_encoder_forward.1} parent=1 // pred_check_branch
      %25 = sbr.rel (0) target = $region25
    $region24: #{ldif_encoder_forward.1} parent=1 // pred_region
      _
    $region25: #{ldif_encoder_forward.1} parent=1 // pred_fallthru
      _
    // Predicated region
    $region26: #{ldif_encoder_forward.1} parent=1 // pred_check
      _
    $region27: #{ldif_encoder_forward.1} parent=1 // pred_check_branch
      %27 = sbr.rel (0) target = $region29
    $region28: #{ldif_encoder_forward.1} parent=1 // pred_region
      _
    $region29: #{ldif_encoder_forward.1} parent=1 // pred_fallthru
      _
    // Predicated region
    $region30: #{ldif_encoder_forward.1} parent=1 // pred_check
      _
    $region31: #{ldif_encoder_forward.1} parent=1 // pred_check_branch
      %29 = sbr.rel (0) target = $region33
    $region32: #{ldif_encoder_forward.1} parent=1 // pred_region
      _
    $region33: #{ldif_encoder_forward.1} parent=1 // pred_fallthru
      _
    // Predicated region
    $region34: #{ldif_encoder_forward.1} parent=1 // pred_check
      _
    $region35: #{ldif_encoder_forward.1} parent=1 // pred_check_branch
      %31 = sbr.rel (0) target = $region37
    $region36: #{ldif_encoder_forward.1} parent=1 // pred_region
      _
    $region37: #{ldif_encoder_forward.1} parent=1 // pred_fallthru
      _
    %v32 = vld [vmem:[%s0] sm:$0xff]
    %v33 = vld [vmem:[%s2] sm:$0xff]
    %v34 = vld [vmem:[%s2 + $0x8] sm:$0xff]
    %v35 = vld [vmem:[%s2 + $0x10] sm:$0xff]
    %v36 = vld [vmem:[%s2 + $0x18] sm:$0xff]
    %v37 = vld [vmem:[%s1] sm:$0xff]
    %v38 = vld [vmem:[%s3] sm:$0xff]
    %vm39 = vcmask 64512
    %v41 = vsel %vm39, %v37, 0
    %43 = vmatpush.msra.mxu0 0.0
    %44 = vmatpush.msra.mxu0 0.0
    %45 = vmatpush.msra.mxu0 0.0
    %46 = vmatpush.msra.mxu0 0.0
    %47 = vmatpush.msra.mxu0 0.0
    %48 = vmatpush.msra.mxu0 0.0
    %49 = vmatpush.msra.mxu0 0.0
    %50 = vmatpush.msra.mxu0 0.0
    %51 = vmatpush.msra.mxu0 0.0
    %52 = vmatpush.msra.mxu0 0.0
    %53 = vmatpush.msra.mxu0 0.0
    %54 = vmatpush.msra.mxu0 0.0
    %55 = vmatpush.msra.mxu0 0.0
    %56 = vmatpush.msra.mxu0 0.0
    %57 = vmatpush.msra.mxu0 0.0
    %58 = vmatpush.msra.mxu0 %v38
    %59 = vmatmul.f32.gmra.mxu0 %v41
    %v60 = vpop.f32.mrf.mxu0
    %v61 = vadd.f32 0.0, %v60
    %62 = vdwg.mxu0
    %vm63 = vcmask 261120
    %v65 = vsel %vm63, %v32, 0
    %67 = vmatpush.msra.mxu0 0.0
    %68 = vmatpush.msra.mxu0 0.0
    %69 = vmatpush.msra.mxu0 0.0
    %70 = vmatpush.msra.mxu0 0.0
    %71 = vmatpush.msra.mxu0 0.0
    %72 = vmatpush.msra.mxu0 0.0
    %73 = vmatpush.msra.mxu0 0.0
    %74 = vmatpush.msra.mxu0 0.0
    %75 = vmatpush.msra.mxu0 0.0
    %76 = vmatpush.msra.mxu0 0.0
    %77 = vmatpush.msra.mxu0 0.0
    %78 = vmatpush.msra.mxu0 0.0
    %79 = vmatpush.msra.mxu0 %v36
    %80 = vmatpush.msra.mxu0 %v35
    %81 = vmatpush.msra.mxu0 %v34
    %82 = vmatpush.msra.mxu0 %v33
    %83 = vmatmul.f32.gmra.mxu0 %v65
    %v84 = vpop.f32.mrf.mxu0
    %v85 = vadd.f32 %v61, %v84
    %86 = vdwg.mxu0
    %v87 = vld [vmem:[%s4] sm:$0x1]
    %v89 = vperm.slane %v87, 0
    %v91 = vadd.f32 %v85, %v89
    %vm92 = vcmp.gt.f32.partialorder %v91, 0.0
    %v93 = vmul.f32 %v91, 0.2
    %v94 = vsel %vm92, %v91, %v93
    %v95 = vld [vmem:[%s5] sm:$0xff]
    %v96 = vld [vmem:[%s5 + $0x8] sm:$0xff]
    %v97 = vld [vmem:[%s5 + $0x10] sm:$0xff]
    %v98 = vld [vmem:[%s5 + $0x18] sm:$0xff]
    %v99 = vld [vmem:[%s5 + $0x20] sm:$0xff]
    %v100 = vld [vmem:[%s5 + $0x28] sm:$0xff]
    %v101 = vld [vmem:[%s5 + $0x30] sm:$0xff]
    %v102 = vld [vmem:[%s5 + $0x38] sm:$0xff]
    %v103 = vld [vmem:[%s5 + $0x40] sm:$0xff]
    %v104 = vld [vmem:[%s5 + $0x48] sm:$0xff]
    %v105 = vld [vmem:[%s5 + $0x50] sm:$0xff]
    %v106 = vld [vmem:[%s5 + $0x58] sm:$0xff]
    %v107 = vld [vmem:[%s5 + $0x60] sm:$0xff]
    %v108 = vld [vmem:[%s5 + $0x68] sm:$0xff]
    %v109 = vld [vmem:[%s5 + $0x70] sm:$0xff]
    %v110 = vld [vmem:[%s5 + $0x78] sm:$0xff]
    %v111 = vld [vmem:[%s6] sm:$0x1]
    %v113 = vperm.slane %v111, 0
    %115 = vmatpush.msra.mxu0 %v110
    %116 = vmatpush.msra.mxu0 %v109
    %117 = vmatpush.msra.mxu0 %v108
    %118 = vmatpush.msra.mxu0 %v107
    %119 = vmatpush.msra.mxu0 %v106
    %120 = vmatpush.msra.mxu0 %v105
    %121 = vmatpush.msra.mxu0 %v104
    %122 = vmatpush.msra.mxu0 %v103
    %123 = vmatpush.msra.mxu0 %v102
    %124 = vmatpush.msra.mxu0 %v101
    %125 = vmatpush.msra.mxu0 %v100
    %126 = vmatpush.msra.mxu0 %v99
    %127 = vmatpush.msra.mxu0 %v98
    %128 = vmatpush.msra.mxu0 %v97
    %129 = vmatpush.msra.mxu0 %v96
    %130 = vmatpush.msra.mxu0 %v95
    %131 = vmatmul.f32.gmra.mxu0 %v94
    %v132 = vpop.f32.mrf.mxu0
    %v133 = vadd.f32 %v113, %v132
    %134 = vdwg.mxu0
    %vm135 = vcmp.gt.f32.partialorder %v133, 0.0
    %v136 = vmul.f32 %v133, 0.2
    %v137 = vsel %vm135, %v133, %v136
    %v138 = vld [vmem:[%s7] sm:$0xff]
    %v139 = vld [vmem:[%s7 + $0x8] sm:$0xff]
    %v140 = vld [vmem:[%s7 + $0x10] sm:$0xff]
    %v141 = vld [vmem:[%s7 + $0x18] sm:$0xff]
    %v142 = vld [vmem:[%s7 + $0x20] sm:$0xff]
    %v143 = vld [vmem:[%s7 + $0x28] sm:$0xff]
    %v144 = vld [vmem:[%s7 + $0x30] sm:$0xff]
    %v145 = vld [vmem:[%s7 + $0x38] sm:$0xff]
    %v146 = vld [vmem:[%s7 + $0x40] sm:$0xff]
    %v147 = vld [vmem:[%s7 + $0x48] sm:$0xff]
    %v148 = vld [vmem:[%s7 + $0x50] sm:$0xff]
    %v149 = vld [vmem:[%s7 + $0x58] sm:$0xff]
    %v150 = vld [vmem:[%s7 + $0x60] sm:$0xff]
    %v151 = vld [vmem:[%s7 + $0x68] sm:$0xff]
    %v152 = vld [vmem:[%s7 + $0x70] sm:$0xff]
    %v153 = vld [vmem:[%s7 + $0x78] sm:$0xff]
    %v154 = vld [vmem:[%s8] sm:$0x1]
    %v156 = vperm.slane %v154, 0
    %158 = vmatpush.msra.mxu0 %v153
    %159 = vmatpush.msra.mxu0 %v152
    %160 = vmatpush.msra.mxu0 %v151
    %161 = vmatpush.msra.mxu0 %v150
    %162 = vmatpush.msra.mxu0 %v149
    %163 = vmatpush.msra.mxu0 %v148
    %164 = vmatpush.msra.mxu0 %v147
    %165 = vmatpush.msra.mxu0 %v146
    %166 = vmatpush.msra.mxu0 %v145
    %167 = vmatpush.msra.mxu0 %v144
    %168 = vmatpush.msra.mxu0 %v143
    %169 = vmatpush.msra.mxu0 %v142
    %170 = vmatpush.msra.mxu0 %v141
    %171 = vmatpush.msra.mxu0 %v140
    %172 = vmatpush.msra.mxu0 %v139
    %173 = vmatpush.msra.mxu0 %v138
    %174 = vmatmul.f32.gmra.mxu0 %v137
    %v175 = vpop.f32.mrf.mxu0
    %v176 = vadd.f32 %v156, %v175
    %177 = vdwg.mxu0
    %178 = vst [vmem:[#allocation2] sm:$0xff] %v176
    // Predicated region
    $region38: #{ldif_encoder_forward.1} parent=1 // pred_check
      _
    $region39: #{ldif_encoder_forward.1} parent=1 // pred_check_branch
      %180 = sbr.rel (0) target = $region41
    $region40: #{ldif_encoder_forward.1} parent=1 // pred_region
      // Predicated region
      $region42: #{ldif_encoder_forward.1} parent=40 // pred_check
        _
      $region43: #{ldif_encoder_forward.1} parent=40 // pred_check_branch
        %182 = sbr.rel (0) target = $region45
      $region44: #{ldif_encoder_forward.1} parent=40 // pred_region
        // Predicated region
        $region46: #{ldif_encoder_forward.1} parent=44 // pred_check
          _
        $region47: #{ldif_encoder_forward.1} parent=44 // pred_check_branch
          %184 = sbr.rel target = $region49
        $region48: #{ldif_encoder_forward.1} parent=44 // pred_region
          // Predicated region
          $region61: #{ldif_encoder_forward.1} parent=48 // pred_check
            _
          $region62: #{ldif_encoder_forward.1} parent=48 // pred_check_branch
            %200 = sbr.rel (0) target = $region64
          $region63: #{ldif_encoder_forward.1} parent=48 // pred_region
            %s202 = ssub.s32 4, 1
            loop: start=0, step=1, limit=1
            $region65: #{ldif_encoder_forward.1} parent=63 // loop_pre_header
              _
            $region66: #{ldif_encoder_forward.1} parent=63 // loop_header
              %s204 = sphi 0, %s208
              %p205 = scmp.ge.s32.totalorder %s204, 1
              %s209 = sphi [#allocation2], [#allocation2]
              %s210 = sphi %s9, %s9
            $region67: #{ldif_encoder_forward.1} parent=63 // loop_header_branch
              %207 = sbr.rel (%p205) target = $region71
            $region68: #{ldif_encoder_forward.1} parent=63 // loop_body
              %v211 = vld [vmem:[%s209] sm:%s202]
              %212 = vst [vmem:[%s210] sm:%s202] %v211
            $region69: #{ldif_encoder_forward.1} parent=63 // loop_footer
              %s208 = sadd.s32 1, %s204
            $region70: #{ldif_encoder_forward.1} parent=63 // loop_footer_branch
              %203 = sbr.rel target = $region66
            $region71: #{ldif_encoder_forward.1} parent=63 // loop_exit
              _
          $region64: #{ldif_encoder_forward.1} parent=48 // pred_fallthru
            _
        $region49: #{ldif_encoder_forward.1} parent=44 // pred_fallthru
          _
        // Predicated region
        $region50: #{ldif_encoder_forward.1} parent=44 // pred_check
          _
        $region51: #{ldif_encoder_forward.1} parent=44 // pred_check_branch
          %186 = sbr.rel (0) target = $region53
        $region52: #{ldif_encoder_forward.1} parent=44 // pred_region
          %s188 = ssub.s32 4, 1
          loop: start=0, step=1, limit=1
          $region54: #{ldif_encoder_forward.1} parent=52 // loop_pre_header
            _
          $region55: #{ldif_encoder_forward.1} parent=52 // loop_header
            %s190 = sphi 0, %s194
            %p191 = scmp.ge.s32.totalorder %s190, 1
            %s195 = sphi [#allocation2], [#allocation2]
            %s196 = sphi %s9, %s9
          $region56: #{ldif_encoder_forward.1} parent=52 // loop_header_branch
            %193 = sbr.rel (%p191) target = $region60
          $region57: #{ldif_encoder_forward.1} parent=52 // loop_body
            %v197 = vld [vmem:[%s195] sm:%s188]
            %198 = vst [vmem:[%s196] sm:%s188] %v197
          $region58: #{ldif_encoder_forward.1} parent=52 // loop_footer
            %s194 = sadd.s32 1, %s190
          $region59: #{ldif_encoder_forward.1} parent=52 // loop_footer_branch
            %189 = sbr.rel target = $region55
          $region60: #{ldif_encoder_forward.1} parent=52 // loop_exit
            _
        $region53: #{ldif_encoder_forward.1} parent=44 // pred_fallthru
          _
      $region45: #{ldif_encoder_forward.1} parent=40 // pred_fallthru
        _
      %213 = vnop
    $region41: #{ldif_encoder_forward.1} parent=1 // pred_fallthru
      _
    // Predicated region
    $region72: #{ldif_encoder_forward.1} parent=1 // pred_check
      _
    $region73: #{ldif_encoder_forward.1} parent=1 // pred_check_branch
      %215 = sbr.rel (0) target = $region75
    $region74: #{ldif_encoder_forward.1} parent=1 // pred_region
      _
    $region75: #{ldif_encoder_forward.1} parent=1 // pred_fallthru
      _

</llo_original>
